<compile_context>
chip_gen: v5e
topology: v5e:2x2
jax: 0.10.0
libtpu: 0.0.40
codegen_flags: <defaults>
</compile_context>

<pallas_src>
import functools

import jax
import jax.numpy as jnp
from jax.experimental import pallas as pl
from jax.experimental.pallas import tpu as pltpu


def _round_up(x, m):
    return ((x + m - 1) // m) * m


def _sublane(itemsize):
    # vreg sublane granularity: 8 rows for 4-byte, 16 for 2-byte, 32 for 1-byte dtypes.
    return 8 * max(1, 4 // max(1, itemsize))


def _pad2d_lane_dense_kernel(x_ref, o_ref, *, left, right, top, bottom, h, w, value):
    """Blocks: x (bb, h*w), o (bb, h_out*w_out) — lane-dense flattened images."""
    dt = o_ref.dtype
    bb = o_ref.shape[0]
    w_out = w + left + right

    # Top / bottom pad rows are contiguous lane runs in the flattened layout.
    if top:
        o_ref[:, : top * w_out] = jnp.full((bb, top * w_out), value, dt)
    if bottom:
        o_ref[:, (top + h) * w_out:] = jnp.full((bb, bottom * w_out), value, dt)

    if left == 0 and right == 0:
        # Interior is one contiguous lane run -> single wide store.
        o_ref[:, top * w: (top + h) * w] = x_ref[...].astype(dt)
        return

    # Hoist pad-column constants out of the row loop (broadcasts are not CSE'd).
    lpad = jnp.full((bb, left), value, dt) if left else None
    rpad = jnp.full((bb, right), value, dt) if right else None

    # h is a static Python int -> fully unrolled; one fused store per output row.
    for r in range(h):
        row = x_ref[:, r * w: (r + 1) * w].astype(dt)
        pieces = [p for p in (lpad, row, rpad) if p is not None]
        row = pieces[0] if len(pieces) == 1 else jnp.concatenate(pieces, axis=-1)
        dst = (top + r) * w_out
        o_ref[:, dst: dst + w_out] = row


def _pad2d_3d_kernel(x_ref, o_ref, *, left, right, top, bottom, h, w, value):
    """Blocks: x (bb, h, w), o (bb, h_out, w_out) — wide-image fallback (W_out >= 128)."""
    dt = o_ref.dtype
    bb = o_ref.shape[0]
    w_out = w + left + right

    # Interior copy — one store of the whole input tile.
    o_ref[:, top: top + h, left: left + w] = x_ref[...].astype(dt)
    # Border strips (static ints: zero-width strips emit no code; one write per element).
    if top:
        o_ref[:, :top, :] = jnp.full((bb, top, w_out), value, dt)
    if bottom:
        o_ref[:, top + h:, :] = jnp.full((bb, bottom, w_out), value, dt)
    if left:
        o_ref[:, top: top + h, :left] = jnp.full((bb, h, left), value, dt)
    if right:
        o_ref[:, top: top + h, left + w:] = jnp.full((bb, h, right), value, dt)


def pad_pool2d(x, left=0, right=1, top=0, bottom=1, value=0.0, *, block_rows=None):
    """Pallas equivalent of Pad_Pool2d(left, right, top, bottom, value)(x), x: (N, C, H, W)."""
    assert min(left, right, top, bottom) >= 0, "negative padding not supported"
    n, c, h, w = x.shape
    h_out = h + top + bottom
    w_out = w + left + right
    b = n * c
    itemsize = jnp.dtype(x.dtype).itemsize
    sub = _sublane(itemsize)

    # ~1 MiB of real data per (input+output) buffer pair: large enough to sit near the
    # HBM roofline, small enough (with double buffering) for every generation's
    # scoped-VMEM default (v5e 16 MiB).
    target_pair_bytes = 2 << 20

    # Lane-dense path whenever the image's lane dim would waste most of a 128-lane vreg
    # (and the static per-row unroll stays small).
    lane_dense = (w_out < 128) and (h_out <= 256)

    if lane_dense:
        in_cols, out_cols = h * w, h_out * w_out
        per_row_bytes = (_round_up(in_cols, 128) + _round_up(out_cols, 128)) * itemsize
        if block_rows is None:
            rows = max(1, target_pair_bytes // per_row_bytes)
            if b >= 2 * sub:
                rows = min(rows, pl.cdiv(b, 2))  # >=2 grid steps -> both v7x TCs stream
            block_rows = rows
        block_rows = max(1, min(int(block_rows), b))
        if block_rows < b:
            # When tiling, keep the sublane (second-minor) block dim tile-aligned.
            block_rows = min(b, _round_up(block_rows, sub))

        grid = (pl.cdiv(b, block_rows),)
        kernel = functools.partial(_pad2d_lane_dense_kernel, left=left, right=right,
                                   top=top, bottom=bottom, h=h, w=w, value=value)
        in_specs = [pl.BlockSpec((block_rows, in_cols), lambda i: (i, 0))]
        out_specs = pl.BlockSpec((block_rows, out_cols), lambda i: (i, 0))
        out_shape = jax.ShapeDtypeStruct((b, out_cols), x.dtype)
        operand = x.reshape(b, in_cols)
        needed = 2 * _round_up(block_rows, sub) * per_row_bytes
    else:
        # Wide images: lane dim is already dense; keep images whole, tile over b only.
        per_img_bytes = (_round_up(h, sub) * _round_up(w, 128)
                         + _round_up(h_out, sub) * _round_up(w_out, 128)) * itemsize
        if block_rows is None:
            rows = max(1, target_pair_bytes // per_img_bytes)
            if b >= 2:
                rows = min(rows, pl.cdiv(b, 2))  # >=2 grid steps for v7x megacore
            block_rows = rows
        block_rows = max(1, min(int(block_rows), b))

        grid = (pl.cdiv(b, block_rows),)
        kernel = functools.partial(_pad2d_3d_kernel, left=left, right=right,
                                   top=top, bottom=bottom, h=h, w=w, value=value)
        in_specs = [pl.BlockSpec((block_rows, h, w), lambda i: (i, 0, 0))]
        out_specs = pl.BlockSpec((block_rows, h_out, w_out), lambda i: (i, 0, 0))
        out_shape = jax.ShapeDtypeStruct((b, h_out, w_out), x.dtype)
        operand = x.reshape(b, h, w)
        needed = 2 * block_rows * per_img_bytes
        # TODO(synk): add an H-tiling grid axis for single images whose padded in+out
        # footprint exceeds physical VMEM (e.g. >4k x 4k f32 on v7x's 64 MiB).

    # Explicit scoped-VMEM budget: actual double-buffered padded footprint + headroom,
    # never below the smallest per-generation default (16 MiB on v5e).
    vmem_limit = int(min(max(needed + needed // 4 + (2 << 20), 16 << 20), 100 << 20))

    out = pl.pallas_call(
        kernel,
        out_shape=out_shape,
        grid=grid,
        in_specs=in_specs,
        out_specs=out_specs,
        compiler_params=pltpu.CompilerParams(
            dimension_semantics=("parallel",),  # image blocks are fully independent
            vmem_limit_bytes=vmem_limit,
        ),
        cost_estimate=pl.CostEstimate(
            flops=0,
            transcendentals=0,
            bytes_accessed=(b * h * w + b * h_out * w_out) * itemsize,
        ),
    )(operand)

    return out.reshape(n, c, h_out, w_out)


if __name__ == "__main__":
    key = jax.random.PRNGKey(0)

    # NCHW input consistent with a 2-D pooling layer: batch=2, channels=4, 16x16.
    x = jax.random.normal(key, (2, 4, 16, 16), dtype=jnp.float32)

    # 1) Default Pad_Pool2d: 0 left / 1 right / 0 top / 1 bottom, value 0.
    out = jax.block_until_ready(pad_pool2d(x))
    ref = jnp.pad(x, ((0, 0), (0, 0), (0, 1), (0, 1)), constant_values=0.0)
    assert out.shape == ref.shape, (out.shape, ref.shape)
    assert jnp.array_equal(out, ref), "default-pad mismatch vs reference"

    # 2) Multi-step grid with a ragged last block (lane-dense pipelined path).
    x2 = jax.random.normal(key, (3, 5, 16, 16), dtype=jnp.float32)
    out2 = jax.block_until_ready(pad_pool2d(x2, block_rows=8))
    ref2 = jnp.pad(x2, ((0, 0), (0, 0), (0, 1), (0, 1)), constant_values=0.0)
    assert jnp.array_equal(out2, ref2), "tiled-pad mismatch vs reference"

    # 3) Non-default padding / value (exercises all four borders + fused row stores).
    out3 = jax.block_until_ready(
        pad_pool2d(x, left=1, right=2, top=2, bottom=1, value=-1.0))
    ref3 = jnp.pad(x, ((0, 0), (0, 0), (2, 1), (1, 2)), constant_values=-1.0)
    assert out3.shape == ref3.shape, (out3.shape, ref3.shape)
    assert jnp.array_equal(out3, ref3), "general-pad mismatch vs reference"

    # 4) Wide-image fallback path (W_out >= 128 -> 3-D blocked kernel).
    x4 = jax.random.normal(key, (2, 2, 8, 128), dtype=jnp.float32)
    out4 = jax.block_until_ready(pad_pool2d(x4))
    ref4 = jnp.pad(x4, ((0, 0), (0, 0), (0, 1), (0, 1)), constant_values=0.0)
    assert jnp.array_equal(out4, ref4), "wide-image fallback mismatch vs reference"

    print("KERNEL_OK")
</pallas_src>

<mosaic_0001>
module attributes {stable_mosaic.version = 11 : i64} {
  func.func @_pad2d_lane_dense_kernel(%arg0: i32, %arg1: memref<8x256xf32, #tpu.memory_space<vmem>>, %arg2: memref<8x289xf32, #tpu.memory_space<vmem>>) attributes {dimension_semantics = [#tpu.dimension_semantics<parallel>], iteration_bounds = array<i64: 1>, scalar_prefetch = 0 : i64, scratch_operands = 0 : i64, tpu.core_type = #tpu.core_type<tc>, window_params = [{transform_indices = @transform_0, window_bounds = array<i64: 8, 256>}, {transform_indices = @transform_1, window_bounds = array<i64: 8, 289>}]} {
    %cst = arith.constant 0.000000e+00 : f32
    %0 = vector.broadcast %cst : f32 to vector<8x17xf32>
    %c0 = arith.constant 0 : index
    %c272 = arith.constant 272 : index
    %1 = vector.load %arg2[%c0, %c272] : memref<8x289xf32, #tpu.memory_space<vmem>>, vector<8x17xf32>
    tpu.vector_store %arg2[%c0, %c272], %0 {strides = array<i32>} : memref<8x289xf32, #tpu.memory_space<vmem>>, vector<8x17xf32>,
    %cst_0 = arith.constant 0.000000e+00 : f32
    %2 = vector.broadcast %cst_0 : f32 to vector<8x1xf32>
    %c0_1 = arith.constant 0 : index
    %c0_2 = arith.constant 0 : index
    %3 = vector.load %arg1[%c0_1, %c0_2] : memref<8x256xf32, #tpu.memory_space<vmem>>, vector<8x16xf32>
    %4 = tpu.concatenate %3, %2 in 1 : vector<8x16xf32>, vector<8x1xf32> -> vector<8x17xf32>
    %c0_3 = arith.constant 0 : index
    %c0_4 = arith.constant 0 : index
    %5 = vector.load %arg2[%c0_3, %c0_4] : memref<8x289xf32, #tpu.memory_space<vmem>>, vector<8x17xf32>
    tpu.vector_store %arg2[%c0_3, %c0_4], %4 {strides = array<i32>} : memref<8x289xf32, #tpu.memory_space<vmem>>, vector<8x17xf32>,
    %c0_5 = arith.constant 0 : index
    %c16 = arith.constant 16 : index
    %6 = vector.load %arg1[%c0_5, %c16] : memref<8x256xf32, #tpu.memory_space<vmem>>, vector<8x16xf32>
    %7 = tpu.concatenate %6, %2 in 1 : vector<8x16xf32>, vector<8x1xf32> -> vector<8x17xf32>
    %c0_6 = arith.constant 0 : index
    %c17 = arith.constant 17 : index
    %8 = vector.load %arg2[%c0_6, %c17] : memref<8x289xf32, #tpu.memory_space<vmem>>, vector<8x17xf32>
    tpu.vector_store %arg2[%c0_6, %c17], %7 {strides = array<i32>} : memref<8x289xf32, #tpu.memory_space<vmem>>, vector<8x17xf32>,
    %c0_7 = arith.constant 0 : index
    %c32 = arith.constant 32 : index
    %9 = vector.load %arg1[%c0_7, %c32] : memref<8x256xf32, #tpu.memory_space<vmem>>, vector<8x16xf32>
    %10 = tpu.concatenate %9, %2 in 1 : vector<8x16xf32>, vector<8x1xf32> -> vector<8x17xf32>
    %c0_8 = arith.constant 0 : index
    %c34 = arith.constant 34 : index
    %11 = vector.load %arg2[%c0_8, %c34] : memref<8x289xf32, #tpu.memory_space<vmem>>, vector<8x17xf32>
    tpu.vector_store %arg2[%c0_8, %c34], %10 {strides = array<i32>} : memref<8x289xf32, #tpu.memory_space<vmem>>, vector<8x17xf32>,
    %c0_9 = arith.constant 0 : index
    %c48 = arith.constant 48 : index
    %12 = vector.load %arg1[%c0_9, %c48] : memref<8x256xf32, #tpu.memory_space<vmem>>, vector<8x16xf32>
    %13 = tpu.concatenate %12, %2 in 1 : vector<8x16xf32>, vector<8x1xf32> -> vector<8x17xf32>
    %c0_10 = arith.constant 0 : index
    %c51 = arith.constant 51 : index
    %14 = vector.load %arg2[%c0_10, %c51] : memref<8x289xf32, #tpu.memory_space<vmem>>, vector<8x17xf32>
    tpu.vector_store %arg2[%c0_10, %c51], %13 {strides = array<i32>} : memref<8x289xf32, #tpu.memory_space<vmem>>, vector<8x17xf32>,
    %c0_11 = arith.constant 0 : index
    %c64 = arith.constant 64 : index
    %15 = vector.load %arg1[%c0_11, %c64] : memref<8x256xf32, #tpu.memory_space<vmem>>, vector<8x16xf32>
    %16 = tpu.concatenate %15, %2 in 1 : vector<8x16xf32>, vector<8x1xf32> -> vector<8x17xf32>
    %c0_12 = arith.constant 0 : index
    %c68 = arith.constant 68 : index
    %17 = vector.load %arg2[%c0_12, %c68] : memref<8x289xf32, #tpu.memory_space<vmem>>, vector<8x17xf32>
    tpu.vector_store %arg2[%c0_12, %c68], %16 {strides = array<i32>} : memref<8x289xf32, #tpu.memory_space<vmem>>, vector<8x17xf32>,
    %c0_13 = arith.constant 0 : index
    %c80 = arith.constant 80 : index
    %18 = vector.load %arg1[%c0_13, %c80] : memref<8x256xf32, #tpu.memory_space<vmem>>, vector<8x16xf32>
    %19 = tpu.concatenate %18, %2 in 1 : vector<8x16xf32>, vector<8x1xf32> -> vector<8x17xf32>
    %c0_14 = arith.constant 0 : index
    %c85 = arith.constant 85 : index
    %20 = vector.load %arg2[%c0_14, %c85] : memref<8x289xf32, #tpu.memory_space<vmem>>, vector<8x17xf32>
    tpu.vector_store %arg2[%c0_14, %c85], %19 {strides = array<i32>} : memref<8x289xf32, #tpu.memory_space<vmem>>, vector<8x17xf32>,
    %c0_15 = arith.constant 0 : index
    %c96 = arith.constant 96 : index
    %21 = vector.load %arg1[%c0_15, %c96] : memref<8x256xf32, #tpu.memory_space<vmem>>, vector<8x16xf32>
    %22 = tpu.concatenate %21, %2 in 1 : vector<8x16xf32>, vector<8x1xf32> -> vector<8x17xf32>
    %c0_16 = arith.constant 0 : index
    %c102 = arith.constant 102 : index
    %23 = vector.load %arg2[%c0_16, %c102] : memref<8x289xf32, #tpu.memory_space<vmem>>, vector<8x17xf32>
    tpu.vector_store %arg2[%c0_16, %c102], %22 {strides = array<i32>} : memref<8x289xf32, #tpu.memory_space<vmem>>, vector<8x17xf32>,
    %c0_17 = arith.constant 0 : index
    %c112 = arith.constant 112 : index
    %24 = vector.load %arg1[%c0_17, %c112] : memref<8x256xf32, #tpu.memory_space<vmem>>, vector<8x16xf32>
    %25 = tpu.concatenate %24, %2 in 1 : vector<8x16xf32>, vector<8x1xf32> -> vector<8x17xf32>
    %c0_18 = arith.constant 0 : index
    %c119 = arith.constant 119 : index
    %26 = vector.load %arg2[%c0_18, %c119] : memref<8x289xf32, #tpu.memory_space<vmem>>, vector<8x17xf32>
    tpu.vector_store %arg2[%c0_18, %c119], %25 {strides = array<i32>} : memref<8x289xf32, #tpu.memory_space<vmem>>, vector<8x17xf32>,
    %c0_19 = arith.constant 0 : index
    %c128 = arith.constant 128 : index
    %27 = vector.load %arg1[%c0_19, %c128] : memref<8x256xf32, #tpu.memory_space<vmem>>, vector<8x16xf32>
    %28 = tpu.concatenate %27, %2 in 1 : vector<8x16xf32>, vector<8x1xf32> -> vector<8x17xf32>
    %c0_20 = arith.constant 0 : index
    %c136 = arith.constant 136 : index
    %29 = vector.load %arg2[%c0_20, %c136] : memref<8x289xf32, #tpu.memory_space<vmem>>, vector<8x17xf32>
    tpu.vector_store %arg2[%c0_20, %c136], %28 {strides = array<i32>} : memref<8x289xf32, #tpu.memory_space<vmem>>, vector<8x17xf32>,
    %c0_21 = arith.constant 0 : index
    %c144 = arith.constant 144 : index
    %30 = vector.load %arg1[%c0_21, %c144] : memref<8x256xf32, #tpu.memory_space<vmem>>, vector<8x16xf32>
    %31 = tpu.concatenate %30, %2 in 1 : vector<8x16xf32>, vector<8x1xf32> -> vector<8x17xf32>
    %c0_22 = arith.constant 0 : index
    %c153 = arith.constant 153 : index
    %32 = vector.load %arg2[%c0_22, %c153] : memref<8x289xf32, #tpu.memory_space<vmem>>, vector<8x17xf32>
    tpu.vector_store %arg2[%c0_22, %c153], %31 {strides = array<i32>} : memref<8x289xf32, #tpu.memory_space<vmem>>, vector<8x17xf32>,
    %c0_23 = arith.constant 0 : index
    %c160 = arith.constant 160 : index
    %33 = vector.load %arg1[%c0_23, %c160] : memref<8x256xf32, #tpu.memory_space<vmem>>, vector<8x16xf32>
    %34 = tpu.concatenate %33, %2 in 1 : vector<8x16xf32>, vector<8x1xf32> -> vector<8x17xf32>
    %c0_24 = arith.constant 0 : index
    %c170 = arith.constant 170 : index
    %35 = vector.load %arg2[%c0_24, %c170] : memref<8x289xf32, #tpu.memory_space<vmem>>, vector<8x17xf32>
    tpu.vector_store %arg2[%c0_24, %c170], %34 {strides = array<i32>} : memref<8x289xf32, #tpu.memory_space<vmem>>, vector<8x17xf32>,
    %c0_25 = arith.constant 0 : index
    %c176 = arith.constant 176 : index
    %36 = vector.load %arg1[%c0_25, %c176] : memref<8x256xf32, #tpu.memory_space<vmem>>, vector<8x16xf32>
    %37 = tpu.concatenate %36, %2 in 1 : vector<8x16xf32>, vector<8x1xf32> -> vector<8x17xf32>
    %c0_26 = arith.constant 0 : index
    %c187 = arith.constant 187 : index
    %38 = vector.load %arg2[%c0_26, %c187] : memref<8x289xf32, #tpu.memory_space<vmem>>, vector<8x17xf32>
    tpu.vector_store %arg2[%c0_26, %c187], %37 {strides = array<i32>} : memref<8x289xf32, #tpu.memory_space<vmem>>, vector<8x17xf32>,
    %c0_27 = arith.constant 0 : index
    %c192 = arith.constant 192 : index
    %39 = vector.load %arg1[%c0_27, %c192] : memref<8x256xf32, #tpu.memory_space<vmem>>, vector<8x16xf32>
    %40 = tpu.concatenate %39, %2 in 1 : vector<8x16xf32>, vector<8x1xf32> -> vector<8x17xf32>
    %c0_28 = arith.constant 0 : index
    %c204 = arith.constant 204 : index
    %41 = vector.load %arg2[%c0_28, %c204] : memref<8x289xf32, #tpu.memory_space<vmem>>, vector<8x17xf32>
    tpu.vector_store %arg2[%c0_28, %c204], %40 {strides = array<i32>} : memref<8x289xf32, #tpu.memory_space<vmem>>, vector<8x17xf32>,
    %c0_29 = arith.constant 0 : index
    %c208 = arith.constant 208 : index
    %42 = vector.load %arg1[%c0_29, %c208] : memref<8x256xf32, #tpu.memory_space<vmem>>, vector<8x16xf32>
    %43 = tpu.concatenate %42, %2 in 1 : vector<8x16xf32>, vector<8x1xf32> -> vector<8x17xf32>
    %c0_30 = arith.constant 0 : index
    %c221 = arith.constant 221 : index
    %44 = vector.load %arg2[%c0_30, %c221] : memref<8x289xf32, #tpu.memory_space<vmem>>, vector<8x17xf32>
    tpu.vector_store %arg2[%c0_30, %c221], %43 {strides = array<i32>} : memref<8x289xf32, #tpu.memory_space<vmem>>, vector<8x17xf32>,
    %c0_31 = arith.constant 0 : index
    %c224 = arith.constant 224 : index
    %45 = vector.load %arg1[%c0_31, %c224] : memref<8x256xf32, #tpu.memory_space<vmem>>, vector<8x16xf32>
    %46 = tpu.concatenate %45, %2 in 1 : vector<8x16xf32>, vector<8x1xf32> -> vector<8x17xf32>
    %c0_32 = arith.constant 0 : index
    %c238 = arith.constant 238 : index
    %47 = vector.load %arg2[%c0_32, %c238] : memref<8x289xf32, #tpu.memory_space<vmem>>, vector<8x17xf32>
    tpu.vector_store %arg2[%c0_32, %c238], %46 {strides = array<i32>} : memref<8x289xf32, #tpu.memory_space<vmem>>, vector<8x17xf32>,
    %c0_33 = arith.constant 0 : index
    %c240 = arith.constant 240 : index
    %48 = vector.load %arg1[%c0_33, %c240] : memref<8x256xf32, #tpu.memory_space<vmem>>, vector<8x16xf32>
    %49 = tpu.concatenate %48, %2 in 1 : vector<8x16xf32>, vector<8x1xf32> -> vector<8x17xf32>
    %c0_34 = arith.constant 0 : index
    %c255 = arith.constant 255 : index
    %50 = vector.load %arg2[%c0_34, %c255] : memref<8x289xf32, #tpu.memory_space<vmem>>, vector<8x17xf32>
    tpu.vector_store %arg2[%c0_34, %c255], %49 {strides = array<i32>} : memref<8x289xf32, #tpu.memory_space<vmem>>, vector<8x17xf32>,
    return
  }
  func.func @transform_0(%arg0: i32) -> (i32, i32) {
    %c0_i32 = arith.constant 0 : i32
    %c0_i32_0 = arith.constant 0 : i32
    return %arg0, %c0_i32 : i32, i32
  }
  func.func @transform_1(%arg0: i32) -> (i32, i32) {
    %c0_i32 = arith.constant 0 : i32
    %c0_i32_0 = arith.constant 0 : i32
    return %arg0, %c0_i32 : i32, i32
  }
}

</mosaic_0001>

<llo_original>
// kernel: tpu_custom_call.1
$region0: #{tpu_custom_call.1}
  #allocation0 [shape = 'u32[]', space=smem, size = 0x4, offset = 0x4, fixed_abs, tag = 'smem constant byte address 0x4 - core index']
  #allocation1 [shape = 'u32[72,128]{1,0:T(1,128)}', space=vmem, size = 0x9000, scoped, tag = 'internal scratch']
  %s0 = inlined_call_operand.hbm [shape: f32[8,256], index: 0, kind: input, shape index: {}]
  %s1 = inlined_call_operand.hbm [shape: f32[8,289], index: 1, kind: output, shape index: {}]
  %s2 = sld [smem:[#allocation0]]
  $region18: #{tpu_custom_call.1} parent=0
    _
  %s4 = ssub.s32 1, %s2
  %s5 = scalar_select 0, %s4, %s2
  $region1: #{tpu_custom_call.1} parent=0
    #allocation2 [shape = 'u8[8192]{0}', space=vmem, size = 0x2000, scoped, tag = 'input window, operand 0, single buffered']
    #allocation3 [shape = 's32[1]{0}', space=sflag, size = 0x4, scoped, tag = 'scoped memory for tpu_custom_call.1']
    #allocation4 [shape = 's32[1]{0}', space=sflag, size = 0x4, scoped, tag = 'scoped memory for tpu_custom_call.1']
    #allocation5 [shape = 'u8[12288]{0}', space=vmem, size = 0x3000, scoped, tag = 'output window, operand 0, single buffered']
    %6 = vsyncpa [#allocation3], 0
    %7 = vsyncpa [#allocation4], 0
    // Predicated region
    $region2: #{tpu_custom_call.1} parent=1 // pred_check
      _
    $region3: #{tpu_custom_call.1} parent=1 // pred_check_branch
      %9 = sbr.rel (0) target = $region5
    $region4: #{tpu_custom_call.1} parent=1 // pred_region
      %11 = vsyncadd [#allocation3], 0
      %s13 = sshll.u32 %s0, 4
      %s14 = int_to_ptr.hbm [resolvable:$true] %s13
      %s15 = sshll.u32 [#allocation2], 4
      %s16 = int_to_ptr.vmem [resolvable:$true] %s15
      %18 = dma.hbm_to_vmem [thread:$0]  %s14, 256, %s16, [#allocation3]
    $region5: #{tpu_custom_call.1} parent=1 // pred_fallthru
      _
    // Predicated region
    $region6: #{tpu_custom_call.1} parent=1 // pred_check
      _
    $region7: #{tpu_custom_call.1} parent=1 // pred_check_branch
      %20 = sbr.rel (0) target = $region9
    $region8: #{tpu_custom_call.1} parent=1 // pred_region
      %22 = dma.done [#allocation3], 256
    $region9: #{tpu_custom_call.1} parent=1 // pred_fallthru
      _
    %vm23 = vcmask 269440
    %24 = vst.msk [vmem:[#allocation5 + $0x10] sm:$0xff] %vm23, 0.0
    %v25 = vld [vmem:[#allocation2] sm:$0xff]
    %vm26 = vcmask 130048
    %v27 = vsel %vm26, %v25, 0.0
    %vm28 = vcmask 138240
    %29 = vst.msk [vmem:[#allocation5] sm:$0xff] %vm28, %v27
    %v30 = vld [vmem:[#allocation2] sm:$0xff]
    %32 = vrot.lane.b32.xlu0 %v30, 112
    %v33 = vpop.permute.xlu0 %32
    %v35 = vsel %vm26, %v33, 0.0
    %37 = vrot.lane.b32.xlu0 %v35, 17
    %v38 = vpop.permute.xlu0 %37
    %vm40 = vcmask 277640
    %41 = vst.msk [vmem:[#allocation5] sm:$0xff] %vm40, %v38
    %v42 = vld [vmem:[#allocation2] sm:$0xff]
    %44 = vrot.lane.b32.xlu0 %v42, 96
    %v45 = vpop.permute.xlu0 %44
    %v47 = vsel %vm26, %v45, 0.0
    %49 = vrot.lane.b32.xlu0 %v47, 34
    %v50 = vpop.permute.xlu0 %49
    %vm52 = vcmask 417040
    %53 = vst.msk [vmem:[#allocation5] sm:$0xff] %vm52, %v50
    %v54 = vld [vmem:[#allocation2] sm:$0xff]
    %56 = vrot.lane.b32.xlu0 %v54, 80
    %v57 = vpop.permute.xlu0 %56
    %v59 = vsel %vm26, %v57, 0.0
    %61 = vrot.lane.b32.xlu0 %v59, 51
    %v62 = vpop.permute.xlu0 %61
    %vm64 = vcmask 556440
    %65 = vst.msk [vmem:[#allocation5] sm:$0xff] %vm64, %v62
    %v66 = vld [vmem:[#allocation2] sm:$0xff]
    %68 = vrot.lane.b32.xlu0 %v66, 64
    %v69 = vpop.permute.xlu0 %68
    %v71 = vsel %vm26, %v69, 0.0
    %73 = vrot.lane.b32.xlu0 %v71, 68
    %v74 = vpop.permute.xlu0 %73
    %vm76 = vcmask 695840
    %77 = vst.msk [vmem:[#allocation5] sm:$0xff] %vm76, %v74
    %v78 = vld [vmem:[#allocation2] sm:$0xff]
    %80 = vrot.lane.b32.xlu0 %v78, 48
    %v81 = vpop.permute.xlu0 %80
    %v83 = vsel %vm26, %v81, 0.0
    %85 = vrot.lane.b32.xlu0 %v83, 85
    %v86 = vpop.permute.xlu0 %85
    %vm88 = vcmask 835240
    %89 = vst.msk [vmem:[#allocation5] sm:$0xff] %vm88, %v86
    %v90 = vld [vmem:[#allocation2] sm:$0xff]
    %92 = vrot.lane.b32.xlu0 %v90, 32
    %v93 = vpop.permute.xlu0 %92
    %v95 = vsel %vm26, %v93, 0.0
    %97 = vrot.lane.b32.xlu0 %v95, 102
    %v98 = vpop.permute.xlu0 %97
    %vm100 = vcmask 974640
    %101 = vst.msk [vmem:[#allocation5] sm:$0xff] %vm100, %v98
    %v102 = vld [vmem:[#allocation2] sm:$0xff]
    %104 = vrot.lane.b32.xlu0 %v102, 16
    %v105 = vpop.permute.xlu0 %104
    %v107 = vsel %vm26, %v105, 0.0
    %109 = vrot.lane.b32.xlu0 %v107, 119
    %v110 = vpop.permute.xlu0 %109
    %vm112 = vcmask 1048504
    %113 = vst.msk [vmem:[#allocation5] sm:$0xff] %vm112, %v110
    %vm114 = vcmask 64512
    %115 = vst.msk [vmem:[#allocation5 + $0x8] sm:$0xff] %vm114, %v110
    %v116 = vld [vmem:[#allocation2 + $0x8] sm:$0xff]
    %v117 = vsel %vm26, %v116, 0.0
    %119 = vrot.lane.b32.xlu0 %v117, 8
    %v120 = vpop.permute.xlu0 %119
    %vm122 = vcmask 203840
    %123 = vst.msk [vmem:[#allocation5 + $0x8] sm:$0xff] %vm122, %v120
    %v124 = vld [vmem:[#allocation2 + $0x8] sm:$0xff]
    %126 = vrot.lane.b32.xlu0 %v124, 112
    %v127 = vpop.permute.xlu0 %126
    %v129 = vsel %vm26, %v127, 0.0
    %131 = vrot.lane.b32.xlu0 %v129, 25
    %v132 = vpop.permute.xlu0 %131
    %vm134 = vcmask 343240
    %135 = vst.msk [vmem:[#allocation5 + $0x8] sm:$0xff] %vm134, %v132
    %v136 = vld [vmem:[#allocation2 + $0x8] sm:$0xff]
    %138 = vrot.lane.b32.xlu0 %v136, 96
    %v139 = vpop.permute.xlu0 %138
    %v141 = vsel %vm26, %v139, 0.0
    %143 = vrot.lane.b32.xlu0 %v141, 42
    %v144 = vpop.permute.xlu0 %143
    %vm146 = vcmask 482640
    %147 = vst.msk [vmem:[#allocation5 + $0x8] sm:$0xff] %vm146, %v144
    %v148 = vld [vmem:[#allocation2 + $0x8] sm:$0xff]
    %150 = vrot.lane.b32.xlu0 %v148, 80
    %v151 = vpop.permute.xlu0 %150
    %v153 = vsel %vm26, %v151, 0.0
    %155 = vrot.lane.b32.xlu0 %v153, 59
    %v156 = vpop.permute.xlu0 %155
    %vm158 = vcmask 622040
    %159 = vst.msk [vmem:[#allocation5 + $0x8] sm:$0xff] %vm158, %v156
    %v160 = vld [vmem:[#allocation2 + $0x8] sm:$0xff]
    %162 = vrot.lane.b32.xlu0 %v160, 64
    %v163 = vpop.permute.xlu0 %162
    %v165 = vsel %vm26, %v163, 0.0
    %167 = vrot.lane.b32.xlu0 %v165, 76
    %v168 = vpop.permute.xlu0 %167
    %vm170 = vcmask 761440
    %171 = vst.msk [vmem:[#allocation5 + $0x8] sm:$0xff] %vm170, %v168
    %v172 = vld [vmem:[#allocation2 + $0x8] sm:$0xff]
    %174 = vrot.lane.b32.xlu0 %v172, 48
    %v175 = vpop.permute.xlu0 %174
    %v177 = vsel %vm26, %v175, 0.0
    %179 = vrot.lane.b32.xlu0 %v177, 93
    %v180 = vpop.permute.xlu0 %179
    %vm182 = vcmask 900840
    %183 = vst.msk [vmem:[#allocation5 + $0x8] sm:$0xff] %vm182, %v180
    %v184 = vld [vmem:[#allocation2 + $0x8] sm:$0xff]
    %186 = vrot.lane.b32.xlu0 %v184, 32
    %v187 = vpop.permute.xlu0 %186
    %v189 = vsel %vm26, %v187, 0.0
    %191 = vrot.lane.b32.xlu0 %v189, 110
    %v192 = vpop.permute.xlu0 %191
    %vm194 = vcmask 1040240
    %195 = vst.msk [vmem:[#allocation5 + $0x8] sm:$0xff] %vm194, %v192
    %v196 = vld [vmem:[#allocation2 + $0x8] sm:$0xff]
    %198 = vrot.lane.b32.xlu0 %v196, 16
    %v199 = vpop.permute.xlu0 %198
    %v201 = vsel %vm26, %v199, 0.0
    %203 = vrot.lane.b32.xlu0 %v201, 127
    %v204 = vpop.permute.xlu0 %203
    %vm206 = vcmask 1048568
    %207 = vst.msk [vmem:[#allocation5 + $0x8] sm:$0xff] %vm206, %v204
    %208 = vst.msk [vmem:[#allocation5 + $0x10] sm:$0xff] %vm26, %v204
    // Predicated region
    $region10: #{tpu_custom_call.1} parent=1 // pred_check
      _
    $region11: #{tpu_custom_call.1} parent=1 // pred_check_branch
      %210 = sbr.rel (0) target = $region13
    $region12: #{tpu_custom_call.1} parent=1 // pred_region
      %212 = vsyncadd [#allocation4], 0
      %s214 = sshll.u32 [#allocation5], 4
      %s215 = int_to_ptr.vmem [resolvable:$true] %s214
      %s216 = sshll.u32 %s1, 4
      %s217 = int_to_ptr.hbm [resolvable:$true] %s216
      %219 = dma.vmem_to_hbm [thread:$0]  %s215, 384, %s217, [#allocation4]
    $region13: #{tpu_custom_call.1} parent=1 // pred_fallthru
      _
    // Predicated region
    $region14: #{tpu_custom_call.1} parent=1 // pred_check
      _
    $region15: #{tpu_custom_call.1} parent=1 // pred_check_branch
      %221 = sbr.rel (0) target = $region17
    $region16: #{tpu_custom_call.1} parent=1 // pred_region
      %223 = dma.done [#allocation4], 384
    $region17: #{tpu_custom_call.1} parent=1 // pred_fallthru
      _
    %224 = vsyncpa [#allocation3], 1
    %225 = vsyncpa [#allocation4], 1

</llo_original>
